<compile_context>
chip_gen: v7x
topology: tpu7x:2x2x1
jax: 0.10.0
libtpu: 0.0.40
codegen_flags: <defaults>
</compile_context>

<pallas_src>
import jax
import jax.numpy as jnp
from jax.experimental import pallas as pl
from jax.experimental.pallas import tpu as pltpu


def _ae_kernel(x_ref, we_ref, be_ref, wd_ref, bd_ref, enc_ref, dec_ref):
    # x_ref:  [TB, Dp]   we_ref: [Dp, Hp]  be_ref: [1, Hp]
    # wd_ref: [Hp, Dp]   bd_ref: [1, Dp]
    x = x_ref[...]

    # encoder: Linear + ReLU  (MXU matmul, f32 accumulation; epilogue in f32)
    pre = jnp.dot(x, we_ref[...], preferred_element_type=jnp.float32)
    enc = jnp.maximum(pre + be_ref[...].astype(jnp.float32), 0.0)
    enc_ref[...] = enc.astype(enc_ref.dtype)

    # decoder: Linear — keep the f32 accumulator flowing into the second matmul.
    dec = jnp.dot(enc, wd_ref[...].astype(jnp.float32),
                  preferred_element_type=jnp.float32)
    dec_ref[...] = (dec + bd_ref[...].astype(jnp.float32)).astype(dec_ref.dtype)


def _round_up(n: int, m: int) -> int:
    return ((n + m - 1) // m) * m


def ae_pretrain_forward(x, w_enc, b_enc, w_dec, b_dec, *, block_b: int = 256):
    """Returns (encoded, decoded), matching AEPretrain.forward for an
    MLP autoencoder (Linear+ReLU encoder, Linear decoder)."""
    B, D_in = x.shape
    D_in2, H = w_enc.shape
    assert D_in2 == D_in and w_dec.shape == (H, D_in)
    assert b_enc.shape == (H,) and b_dec.shape == (D_in,)

    dt = x.dtype
    isz = jnp.dtype(dt).itemsize

    # Lane-dense padding: last dims to multiples of 128 lanes (exact, see header).
    Hp = _round_up(max(H, 128), 128)
    Dp = _round_up(max(D_in, 128), 128)

    # Batch tile: multiple of 8 sublanes, clamped to the (rounded-up) batch.
    TB = min(block_b, _round_up(B, 8))
    Bp = _round_up(B, TB)

    xp = jnp.pad(x, ((0, Bp - B), (0, Dp - D_in)))
    wep = jnp.pad(w_enc.astype(dt), ((0, Dp - D_in), (0, Hp - H)))
    bep = jnp.pad(b_enc.astype(dt), (0, Hp - H)).reshape(1, Hp)
    wdp = jnp.pad(w_dec.astype(dt), ((0, Hp - H), (0, Dp - D_in)))
    bdp = jnp.pad(b_dec.astype(dt), (0, Dp - D_in)).reshape(1, Dp)

    grid = (Bp // TB,)

    # VMEM budget from actual buffer sizes: double-buffered batch tiles
    # (x + enc + dec) + resident weights/biases + headroom; <= 48 MiB so it
    # never approaches v7x's 64 MiB physical VMEM.
    tile_bytes = TB * (2 * Dp + Hp) * isz
    resident_bytes = (2 * Dp * Hp + Hp + Dp) * isz
    vmem_bytes = int(min(2 * tile_bytes + 2 * resident_bytes + (8 << 20),
                         48 << 20))

    enc_p, dec_p = pl.pallas_call(
        _ae_kernel,
        out_shape=(
            jax.ShapeDtypeStruct((Bp, Hp), dt),
            jax.ShapeDtypeStruct((Bp, Dp), dt),
        ),
        grid=grid,
        in_specs=[
            pl.BlockSpec((TB, Dp), lambda i: (i, 0)),   # x: tiled over batch
            pl.BlockSpec((Dp, Hp), lambda i: (0, 0)),   # w_enc: VMEM-resident
            pl.BlockSpec((1, Hp), lambda i: (0, 0)),    # b_enc: VMEM-resident
            pl.BlockSpec((Hp, Dp), lambda i: (0, 0)),   # w_dec: VMEM-resident
            pl.BlockSpec((1, Dp), lambda i: (0, 0)),    # b_dec: VMEM-resident
        ],
        out_specs=(
            pl.BlockSpec((TB, Hp), lambda i: (i, 0)),
            pl.BlockSpec((TB, Dp), lambda i: (i, 0)),
        ),
        compiler_params=pltpu.CompilerParams(
            dimension_semantics=("parallel",),
            vmem_limit_bytes=vmem_bytes,
        ),
    )(xp, wep, bep, wdp, bdp)

    # TODO(synk): for very large D_in (>~4-8K) add a K-reduction grid axis with
    # an f32 accumulator instead of loading full [Dp, Hp] weight blocks.
    return enc_p[:B, :H], dec_p[:B, :D_in]


def _reference(x, w_enc, b_enc, w_dec, b_dec):
    enc = jnp.maximum(x @ w_enc + b_enc, 0.0)
    dec = enc @ w_dec + b_dec
    return enc, dec


def _make_inputs(key, B, D_in, H, dtype=jnp.float32):
    kx, k1, k2, k3, k4 = jax.random.split(key, 5)
    x = jax.random.normal(kx, (B, D_in), dtype=dtype)
    w_enc = jax.random.normal(k1, (D_in, H), dtype=dtype) * (1.0 / jnp.sqrt(D_in))
    b_enc = jax.random.normal(k2, (H,), dtype=dtype) * 0.01
    w_dec = jax.random.normal(k3, (H, D_in), dtype=dtype) * (1.0 / jnp.sqrt(H))
    b_dec = jax.random.normal(k4, (D_in,), dtype=dtype) * 0.01
    return x, w_enc, b_enc, w_dec, b_dec


if __name__ == "__main__":
    key = jax.random.PRNGKey(0)
    k_small, k_big = jax.random.split(key, 2)

    fwd = jax.jit(ae_pretrain_forward, static_argnames=("block_b",))

    # Small shapes consistent with an MLP autoencoder forward.
    B, D_IN, H = 8, 128, 32
    args = _make_inputs(k_small, B, D_IN, H)
    encoded, decoded = fwd(*args)
    jax.block_until_ready((encoded, decoded))

    enc_ref, dec_ref = _reference(*args)
    assert encoded.shape == (B, H) and decoded.shape == (B, D_IN)
    assert jnp.allclose(encoded, enc_ref, atol=1e-5, rtol=1e-5)
    assert jnp.allclose(decoded, dec_ref, atol=1e-5, rtol=1e-5)

    # Second check: non-128-multiple dims + multi-step batch grid (padding path).
    B2, D2, H2 = 272, 200, 96
    args2 = _make_inputs(k_big, B2, D2, H2)
    encoded2, decoded2 = fwd(*args2, block_b=128)
    jax.block_until_ready((encoded2, decoded2))

    enc_ref2, dec_ref2 = _reference(*args2)
    assert encoded2.shape == (B2, H2) and decoded2.shape == (B2, D2)
    assert jnp.allclose(encoded2, enc_ref2, atol=1e-5, rtol=1e-5)
    assert jnp.allclose(decoded2, dec_ref2, atol=1e-5, rtol=1e-5)

    print("KERNEL_OK")
</pallas_src>

<mosaic_0001>
module attributes {stable_mosaic.version = 11 : i64} {
  func.func @_ae_kernel(%arg0: i32, %arg1: memref<8x128xf32, #tpu.memory_space<vmem>>, %arg2: memref<128x128xf32, #tpu.memory_space<vmem>>, %arg3: memref<1x128xf32, #tpu.memory_space<vmem>>, %arg4: memref<128x128xf32, #tpu.memory_space<vmem>>, %arg5: memref<1x128xf32, #tpu.memory_space<vmem>>, %arg6: memref<8x128xf32, #tpu.memory_space<vmem>>, %arg7: memref<8x128xf32, #tpu.memory_space<vmem>>) attributes {dimension_semantics = [#tpu.dimension_semantics<parallel>], iteration_bounds = array<i64: 1>, scalar_prefetch = 0 : i64, scratch_operands = 0 : i64, tpu.core_type = #tpu.core_type<tc>, window_params = [{transform_indices = @transform_0, window_bounds = array<i64: 8, 128>}, {pipeline_mode = #tpu.pipeline_mode<synchronous>, transform_indices = @transform_1, window_bounds = array<i64: 128, 128>}, {pipeline_mode = #tpu.pipeline_mode<synchronous>, transform_indices = @transform_2, window_bounds = array<i64: 1, 128>}, {pipeline_mode = #tpu.pipeline_mode<synchronous>, transform_indices = @transform_3, window_bounds = array<i64: 128, 128>}, {pipeline_mode = #tpu.pipeline_mode<synchronous>, transform_indices = @transform_4, window_bounds = array<i64: 1, 128>}, {transform_indices = @transform_5, window_bounds = array<i64: 8, 128>}, {transform_indices = @transform_6, window_bounds = array<i64: 8, 128>}]} {
    %c0 = arith.constant 0 : index
    %c0_0 = arith.constant 0 : index
    %0 = vector.load %arg1[%c0, %c0_0] : memref<8x128xf32, #tpu.memory_space<vmem>>, vector<8x128xf32>
    %c0_1 = arith.constant 0 : index
    %c0_2 = arith.constant 0 : index
    %1 = vector.load %arg2[%c0_1, %c0_2] : memref<128x128xf32, #tpu.memory_space<vmem>>, vector<128x128xf32>
    %cst = arith.constant dense<0.000000e+00> : vector<8x128xf32>
    %2 = tpu.matmul %0, %1, %cst {dimension_numbers = #tpu.dot_dimension_numbers<[1], [0], [0], [1], [0, 0, 1, 1], [], []>} : vector<8x128xf32>, vector<128x128xf32>, vector<8x128xf32> -> vector<8x128xf32>
    %c0_3 = arith.constant 0 : index
    %c0_4 = arith.constant 0 : index
    %3 = vector.load %arg3[%c0_3, %c0_4] : memref<1x128xf32, #tpu.memory_space<vmem>>, vector<1x128xf32>
    %4 = vector.broadcast %3 : vector<1x128xf32> to vector<8x128xf32>
    %5 = arith.addf %2, %4 : vector<8x128xf32>
    %cst_5 = arith.constant 0.000000e+00 : f32
    %6 = vector.broadcast %cst_5 : f32 to vector<8x128xf32>
    %7 = arith.maximumf %5, %6 : vector<8x128xf32>
    %c0_6 = arith.constant 0 : index
    %c0_7 = arith.constant 0 : index
    %8 = vector.load %arg6[%c0_6, %c0_7] : memref<8x128xf32, #tpu.memory_space<vmem>>, vector<8x128xf32>
    tpu.vector_store %arg6[%c0_6, %c0_7], %7 {strides = array<i32>} : memref<8x128xf32, #tpu.memory_space<vmem>>, vector<8x128xf32>,
    %c0_8 = arith.constant 0 : index
    %c0_9 = arith.constant 0 : index
    %9 = vector.load %arg4[%c0_8, %c0_9] : memref<128x128xf32, #tpu.memory_space<vmem>>, vector<128x128xf32>
    %cst_10 = arith.constant dense<0.000000e+00> : vector<8x128xf32>
    %10 = tpu.matmul %7, %9, %cst_10 {dimension_numbers = #tpu.dot_dimension_numbers<[1], [0], [0], [1], [0, 0, 1, 1], [], []>} : vector<8x128xf32>, vector<128x128xf32>, vector<8x128xf32> -> vector<8x128xf32>
    %c0_11 = arith.constant 0 : index
    %c0_12 = arith.constant 0 : index
    %11 = vector.load %arg5[%c0_11, %c0_12] : memref<1x128xf32, #tpu.memory_space<vmem>>, vector<1x128xf32>
    %12 = vector.broadcast %11 : vector<1x128xf32> to vector<8x128xf32>
    %13 = arith.addf %10, %12 : vector<8x128xf32>
    %c0_13 = arith.constant 0 : index
    %c0_14 = arith.constant 0 : index
    %14 = vector.load %arg7[%c0_13, %c0_14] : memref<8x128xf32, #tpu.memory_space<vmem>>, vector<8x128xf32>
    tpu.vector_store %arg7[%c0_13, %c0_14], %13 {strides = array<i32>} : memref<8x128xf32, #tpu.memory_space<vmem>>, vector<8x128xf32>,
    return
  }
  func.func @transform_0(%arg0: i32) -> (i32, i32) {
    %c0_i32 = arith.constant 0 : i32
    %c0_i32_0 = arith.constant 0 : i32
    return %arg0, %c0_i32 : i32, i32
  }
  func.func @transform_1(%arg0: i32) -> (i32, i32) {
    %c0_i32 = arith.constant 0 : i32
    %c0_i32_0 = arith.constant 0 : i32
    %c0_i32_1 = arith.constant 0 : i32
    return %c0_i32, %c0_i32_0 : i32, i32
  }
  func.func @transform_2(%arg0: i32) -> (i32, i32) {
    %c0_i32 = arith.constant 0 : i32
    %c0_i32_0 = arith.constant 0 : i32
    %c0_i32_1 = arith.constant 0 : i32
    return %c0_i32, %c0_i32_0 : i32, i32
  }
  func.func @transform_3(%arg0: i32) -> (i32, i32) {
    %c0_i32 = arith.constant 0 : i32
    %c0_i32_0 = arith.constant 0 : i32
    %c0_i32_1 = arith.constant 0 : i32
    return %c0_i32, %c0_i32_0 : i32, i32
  }
  func.func @transform_4(%arg0: i32) -> (i32, i32) {
    %c0_i32 = arith.constant 0 : i32
    %c0_i32_0 = arith.constant 0 : i32
    %c0_i32_1 = arith.constant 0 : i32
    return %c0_i32, %c0_i32_0 : i32, i32
  }
  func.func @transform_5(%arg0: i32) -> (i32, i32) {
    %c0_i32 = arith.constant 0 : i32
    %c0_i32_0 = arith.constant 0 : i32
    return %arg0, %c0_i32 : i32, i32
  }
  func.func @transform_6(%arg0: i32) -> (i32, i32) {
    %c0_i32 = arith.constant 0 : i32
    %c0_i32_0 = arith.constant 0 : i32
    return %arg0, %c0_i32 : i32, i32
  }
}

</mosaic_0001>

<llo_original>
// kernel: ae_pretrain_forward.1
$region0: #{ae_pretrain_forward.1}
  #allocation0 [shape = 'u32[]', space=smem, size = 0x4, offset = 0x4, fixed_abs, tag = 'smem constant byte address 0x4 - core index']
  #allocation1 [shape = 'u32[144,128]{1,0:T(1,128)}', space=vmem, size = 0x12000, scoped, tag = 'internal scratch']
  %s0 = inlined_call_operand.vmem [shape: f32[8,128], index: 0, kind: input, shape index: {}]
  %s1 = inlined_call_operand.vmem [shape: f32[128,128], index: 1, kind: input, shape index: {}]
  %s2 = inlined_call_operand.vmem [shape: f32[1,128], index: 2, kind: input, shape index: {}]
  %s3 = inlined_call_operand.vmem [shape: f32[128,128], index: 3, kind: input, shape index: {}]
  %s4 = inlined_call_operand.vmem [shape: f32[1,128], index: 4, kind: input, shape index: {}]
  %s5 = inlined_call_operand.hbm [shape: f32[8,128], index: 5, kind: output, shape index: {0}]
  %s6 = inlined_call_operand.hbm [shape: f32[8,128], index: 6, kind: output, shape index: {1}]
  %7 = xla_tuple %s5, %s6
  %s8 = sld [smem:[#allocation0]]
  $region38: #{ae_pretrain_forward.1} parent=0
    _
  %s10 = ssub.s32 1, %s8
  %s11 = scalar_select 0, %s10, %s8
  $region1: #{ae_pretrain_forward.1} parent=0
    #allocation2 [shape = 'u8[4096]{0}', space=vmem, size = 0x1000, scoped, tag = 'output window, operand 0, single buffered']
    #allocation3 [shape = 's32[1]{0}', space=sflag, size = 0x4, scoped, tag = 'scoped memory for ae_pretrain_forward.1']
    #allocation4 [shape = 'u8[4096]{0}', space=vmem, size = 0x1000, scoped, tag = 'output window, operand 1, single buffered']
    #allocation5 [shape = 's32[1]{0}', space=sflag, size = 0x4, scoped, tag = 'scoped memory for ae_pretrain_forward.1']
    %12 = vsyncpa [#allocation3], 0
    %13 = vsyncpa [#allocation5], 0
    // Predicated region
    $region2: #{ae_pretrain_forward.1} parent=1 // pred_check
      _
    $region3: #{ae_pretrain_forward.1} parent=1 // pred_check_branch
      %15 = sbr.rel (0) target = $region5
    $region4: #{ae_pretrain_forward.1} parent=1 // pred_region
      _
    $region5: #{ae_pretrain_forward.1} parent=1 // pred_fallthru
      _
    // Predicated region
    $region6: #{ae_pretrain_forward.1} parent=1 // pred_check
      _
    $region7: #{ae_pretrain_forward.1} parent=1 // pred_check_branch
      %17 = sbr.rel (0) target = $region9
    $region8: #{ae_pretrain_forward.1} parent=1 // pred_region
      _
    $region9: #{ae_pretrain_forward.1} parent=1 // pred_fallthru
      _
    // Predicated region
    $region10: #{ae_pretrain_forward.1} parent=1 // pred_check
      _
    $region11: #{ae_pretrain_forward.1} parent=1 // pred_check_branch
      %19 = sbr.rel (0) target = $region13
    $region12: #{ae_pretrain_forward.1} parent=1 // pred_region
      _
    $region13: #{ae_pretrain_forward.1} parent=1 // pred_fallthru
      _
    // Predicated region
    $region14: #{ae_pretrain_forward.1} parent=1 // pred_check
      _
    $region15: #{ae_pretrain_forward.1} parent=1 // pred_check_branch
      %21 = sbr.rel (0) target = $region17
    $region16: #{ae_pretrain_forward.1} parent=1 // pred_region
      _
    $region17: #{ae_pretrain_forward.1} parent=1 // pred_fallthru
      _
    // Predicated region
    $region18: #{ae_pretrain_forward.1} parent=1 // pred_check
      _
    $region19: #{ae_pretrain_forward.1} parent=1 // pred_check_branch
      %23 = sbr.rel (0) target = $region21
    $region20: #{ae_pretrain_forward.1} parent=1 // pred_region
      _
    $region21: #{ae_pretrain_forward.1} parent=1 // pred_fallthru
      _
    %v24 = vld [vmem:[%s0] sm:$0xff]
    %v25 = vld [vmem:[%s1] sm:$0xff]
    %v26 = vld [vmem:[%s1 + $0x8] sm:$0xff]
    %v27 = vld [vmem:[%s1 + $0x10] sm:$0xff]
    %v28 = vld [vmem:[%s1 + $0x18] sm:$0xff]
    %v29 = vld [vmem:[%s1 + $0x20] sm:$0xff]
    %v30 = vld [vmem:[%s1 + $0x28] sm:$0xff]
    %v31 = vld [vmem:[%s1 + $0x30] sm:$0xff]
    %v32 = vld [vmem:[%s1 + $0x38] sm:$0xff]
    %v33 = vld [vmem:[%s1 + $0x40] sm:$0xff]
    %v34 = vld [vmem:[%s1 + $0x48] sm:$0xff]
    %v35 = vld [vmem:[%s1 + $0x50] sm:$0xff]
    %v36 = vld [vmem:[%s1 + $0x58] sm:$0xff]
    %v37 = vld [vmem:[%s1 + $0x60] sm:$0xff]
    %v38 = vld [vmem:[%s1 + $0x68] sm:$0xff]
    %v39 = vld [vmem:[%s1 + $0x70] sm:$0xff]
    %v40 = vld [vmem:[%s1 + $0x78] sm:$0xff]
    %v41 = vld [vmem:[%s2] sm:$0x1]
    %v43 = vlaneseq
    %v44 = vshrl.u32 %v43, 7
    %v45 = vsub.s32 0, %v44
    %v46 = vrot.slane %v41, %v45
    %48 = vmatprep.subr.mxu0 0.0
    %49 = vmatpush1.msra.mxu0 %v25
    %50 = vmatprep.subr.mxu0 0.0
    %51 = vmatpush1.msra.mxu0 %v26
    %52 = vmatprep.subr.mxu0 0.0
    %53 = vmatpush1.msra.mxu0 %v27
    %54 = vmatprep.subr.mxu0 0.0
    %55 = vmatpush1.msra.mxu0 %v28
    %56 = vmatprep.subr.mxu0 0.0
    %57 = vmatpush1.msra.mxu0 %v29
    %58 = vmatprep.subr.mxu0 0.0
    %59 = vmatpush1.msra.mxu0 %v30
    %60 = vmatprep.subr.mxu0 0.0
    %61 = vmatpush1.msra.mxu0 %v31
    %62 = vmatprep.subr.mxu0 0.0
    %63 = vmatpush1.msra.mxu0 %v32
    %64 = vmatprep.subr.mxu0 0.0
    %65 = vmatpush1.msra.mxu0 %v33
    %66 = vmatprep.subr.mxu0 0.0
    %67 = vmatpush1.msra.mxu0 %v34
    %68 = vmatprep.subr.mxu0 0.0
    %69 = vmatpush1.msra.mxu0 %v35
    %70 = vmatprep.subr.mxu0 0.0
    %71 = vmatpush1.msra.mxu0 %v36
    %72 = vmatprep.subr.mxu0 0.0
    %73 = vmatpush1.msra.mxu0 %v37
    %74 = vmatprep.subr.mxu0 0.0
    %75 = vmatpush1.msra.mxu0 %v38
    %76 = vmatprep.subr.mxu0 0.0
    %77 = vmatpush1.msra.mxu0 %v39
    %78 = vmatprep.subr.mxu0 0.0
    %79 = vmatpush1.msra.mxu0 %v40
    %80 = vmatprep.subr.mxu0 0.0
    %81 = vmatpush1.msra.mxu0 0.0
    %82 = vmatprep.subr.mxu0 0.0
    %83 = vmatpush1.msra.mxu0 0.0
    %84 = vmatprep.subr.mxu0 0.0
    %85 = vmatpush1.msra.mxu0 0.0
    %86 = vmatprep.subr.mxu0 0.0
    %87 = vmatpush1.msra.mxu0 0.0
    %88 = vmatprep.subr.mxu0 0.0
    %89 = vmatpush1.msra.mxu0 0.0
    %90 = vmatprep.subr.mxu0 0.0
    %91 = vmatpush1.msra.mxu0 0.0
    %92 = vmatprep.subr.mxu0 0.0
    %93 = vmatpush1.msra.mxu0 0.0
    %94 = vmatprep.subr.mxu0 0.0
    %95 = vmatpush1.msra.mxu0 0.0
    %96 = vmatprep.subr.mxu0 0.0
    %97 = vmatpush1.msra.mxu0 0.0
    %98 = vmatprep.subr.mxu0 0.0
    %99 = vmatpush1.msra.mxu0 0.0
    %100 = vmatprep.subr.mxu0 0.0
    %101 = vmatpush1.msra.mxu0 0.0
    %102 = vmatprep.subr.mxu0 0.0
    %103 = vmatpush1.msra.mxu0 0.0
    %104 = vmatprep.subr.mxu0 0.0
    %105 = vmatpush1.msra.mxu0 0.0
    %106 = vmatprep.subr.mxu0 0.0
    %107 = vmatpush1.msra.mxu0 0.0
    %108 = vmatprep.subr.mxu0 0.0
    %109 = vmatpush1.msra.mxu0 0.0
    %110 = vmatprep.subr.mxu0 0.0
    %111 = vmatpush1.msra.mxu0 0.0
    %112 = vmatprep.mubr.f32.mxu0 0.0
    %113 = vmatmul.mubr.f32.gmra.mrb[0].mxu0 %v24
    %v114 = vpop.f32.mrb[0].mxu0
    %v115 = vadd.f32 %v46, %v114
    %v116 = vpop.f32.mrb[0].mxu0
    %117 = vdwg.mxu0
    %v118 = vmax.f32 %v115, 0.0
    %119 = vst [vmem:[#allocation2] sm:$0xff] %v118
    %v120 = vld [vmem:[%s3] sm:$0xff]
    %v121 = vld [vmem:[%s3 + $0x8] sm:$0xff]
    %v122 = vld [vmem:[%s3 + $0x10] sm:$0xff]
    %v123 = vld [vmem:[%s3 + $0x18] sm:$0xff]
    %v124 = vld [vmem:[%s3 + $0x20] sm:$0xff]
    %v125 = vld [vmem:[%s3 + $0x28] sm:$0xff]
    %v126 = vld [vmem:[%s3 + $0x30] sm:$0xff]
    %v127 = vld [vmem:[%s3 + $0x38] sm:$0xff]
    %v128 = vld [vmem:[%s3 + $0x40] sm:$0xff]
    %v129 = vld [vmem:[%s3 + $0x48] sm:$0xff]
    %v130 = vld [vmem:[%s3 + $0x50] sm:$0xff]
    %v131 = vld [vmem:[%s3 + $0x58] sm:$0xff]
    %v132 = vld [vmem:[%s3 + $0x60] sm:$0xff]
    %v133 = vld [vmem:[%s3 + $0x68] sm:$0xff]
    %v134 = vld [vmem:[%s3 + $0x70] sm:$0xff]
    %v135 = vld [vmem:[%s3 + $0x78] sm:$0xff]
    %v136 = vld [vmem:[%s4] sm:$0x1]
    %v138 = vlaneseq
    %v139 = vshrl.u32 %v138, 7
    %v140 = vsub.s32 0, %v139
    %v141 = vrot.slane %v136, %v140
    %143 = vmatprep.subr.mxu0 0.0
    %144 = vmatpush1.msra.mxu0 %v120
    %145 = vmatprep.subr.mxu0 0.0
    %146 = vmatpush1.msra.mxu0 %v121
    %147 = vmatprep.subr.mxu0 0.0
    %148 = vmatpush1.msra.mxu0 %v122
    %149 = vmatprep.subr.mxu0 0.0
    %150 = vmatpush1.msra.mxu0 %v123
    %151 = vmatprep.subr.mxu0 0.0
    %152 = vmatpush1.msra.mxu0 %v124
    %153 = vmatprep.subr.mxu0 0.0
    %154 = vmatpush1.msra.mxu0 %v125
    %155 = vmatprep.subr.mxu0 0.0
    %156 = vmatpush1.msra.mxu0 %v126
    %157 = vmatprep.subr.mxu0 0.0
    %158 = vmatpush1.msra.mxu0 %v127
    %159 = vmatprep.subr.mxu0 0.0
    %160 = vmatpush1.msra.mxu0 %v128
    %161 = vmatprep.subr.mxu0 0.0
    %162 = vmatpush1.msra.mxu0 %v129
    %163 = vmatprep.subr.mxu0 0.0
    %164 = vmatpush1.msra.mxu0 %v130
    %165 = vmatprep.subr.mxu0 0.0
    %166 = vmatpush1.msra.mxu0 %v131
    %167 = vmatprep.subr.mxu0 0.0
    %168 = vmatpush1.msra.mxu0 %v132
    %169 = vmatprep.subr.mxu0 0.0
    %170 = vmatpush1.msra.mxu0 %v133
    %171 = vmatprep.subr.mxu0 0.0
    %172 = vmatpush1.msra.mxu0 %v134
    %173 = vmatprep.subr.mxu0 0.0
    %174 = vmatpush1.msra.mxu0 %v135
    %175 = vmatprep.subr.mxu0 0.0
    %176 = vmatpush1.msra.mxu0 0.0
    %177 = vmatprep.subr.mxu0 0.0
    %178 = vmatpush1.msra.mxu0 0.0
    %179 = vmatprep.subr.mxu0 0.0
    %180 = vmatpush1.msra.mxu0 0.0
    %181 = vmatprep.subr.mxu0 0.0
    %182 = vmatpush1.msra.mxu0 0.0
    %183 = vmatprep.subr.mxu0 0.0
    %184 = vmatpush1.msra.mxu0 0.0
    %185 = vmatprep.subr.mxu0 0.0
    %186 = vmatpush1.msra.mxu0 0.0
    %187 = vmatprep.subr.mxu0 0.0
    %188 = vmatpush1.msra.mxu0 0.0
    %189 = vmatprep.subr.mxu0 0.0
    %190 = vmatpush1.msra.mxu0 0.0
    %191 = vmatprep.subr.mxu0 0.0
    %192 = vmatpush1.msra.mxu0 0.0
    %193 = vmatprep.subr.mxu0 0.0
    %194 = vmatpush1.msra.mxu0 0.0
    %195 = vmatprep.subr.mxu0 0.0
    %196 = vmatpush1.msra.mxu0 0.0
    %197 = vmatprep.subr.mxu0 0.0
    %198 = vmatpush1.msra.mxu0 0.0
    %199 = vmatprep.subr.mxu0 0.0
    %200 = vmatpush1.msra.mxu0 0.0
    %201 = vmatprep.subr.mxu0 0.0
    %202 = vmatpush1.msra.mxu0 0.0
    %203 = vmatprep.subr.mxu0 0.0
    %204 = vmatpush1.msra.mxu0 0.0
    %205 = vmatprep.subr.mxu0 0.0
    %206 = vmatpush1.msra.mxu0 0.0
    %207 = vmatprep.mubr.f32.mxu0 0.0
    %208 = vmatmul.mubr.f32.gmra.mrb[0].mxu0 %v118
    %v209 = vpop.f32.mrb[0].mxu0
    %v210 = vadd.f32 %v141, %v209
    %v211 = vpop.f32.mrb[0].mxu0
    %212 = vdwg.mxu0
    %213 = vst [vmem:[#allocation4] sm:$0xff] %v210
    // Predicated region
    $region22: #{ae_pretrain_forward.1} parent=1 // pred_check
      _
    $region23: #{ae_pretrain_forward.1} parent=1 // pred_check_branch
      %215 = sbr.rel (0) target = $region25
    $region24: #{ae_pretrain_forward.1} parent=1 // pred_region
      %s217 = ssub.s32 128, 128
      %218 = vsyncadd [#allocation3], %s217
      %s220 = sshll.u32 [#allocation2], 4
      %s221 = int_to_ptr.vmem [resolvable:$true] %s220
      %223 = dma.vmem_to_hbm [thread:$0]  %s221, 128, %s5, [#allocation3]
    $region25: #{ae_pretrain_forward.1} parent=1 // pred_fallthru
      _
    // Predicated region
    $region26: #{ae_pretrain_forward.1} parent=1 // pred_check
      _
    $region27: #{ae_pretrain_forward.1} parent=1 // pred_check_branch
      %225 = sbr.rel (0) target = $region29
    $region28: #{ae_pretrain_forward.1} parent=1 // pred_region
      %s227 = ssub.s32 128, 128
      %228 = vsyncadd [#allocation5], %s227
      %s230 = sshll.u32 [#allocation4], 4
      %s231 = int_to_ptr.vmem [resolvable:$true] %s230
      %233 = dma.vmem_to_hbm [thread:$0]  %s231, 128, %s6, [#allocation5]
    $region29: #{ae_pretrain_forward.1} parent=1 // pred_fallthru
      _
    // Predicated region
    $region30: #{ae_pretrain_forward.1} parent=1 // pred_check
      _
    $region31: #{ae_pretrain_forward.1} parent=1 // pred_check_branch
      %235 = sbr.rel (0) target = $region33
    $region32: #{ae_pretrain_forward.1} parent=1 // pred_region
      %236 = dma.done [#allocation3], 128
    $region33: #{ae_pretrain_forward.1} parent=1 // pred_fallthru
      _
    // Predicated region
    $region34: #{ae_pretrain_forward.1} parent=1 // pred_check
      _
    $region35: #{ae_pretrain_forward.1} parent=1 // pred_check_branch
      %238 = sbr.rel (0) target = $region37
    $region36: #{ae_pretrain_forward.1} parent=1 // pred_region
      %239 = dma.done [#allocation5], 128
    $region37: #{ae_pretrain_forward.1} parent=1 // pred_fallthru
      _
    %240 = vsyncpa [#allocation3], 1
    %241 = vsyncpa [#allocation5], 1

</llo_original>
